<compile_context>
chip_gen: v5e
topology: v5e:2x2
jax: 0.10.0
libtpu: 0.0.40
codegen_flags: <defaults>
</compile_context>

<pallas_src>
import jax
import jax.numpy as jnp
from jax.experimental import pallas as pl
from jax.experimental.pallas import tpu as pltpu

OBS = 8                  # observation dim
H = 32                   # hidden dim
ACT = 4                  # action dim
HEADS = 2 * ACT + 1      # mu(ACT) | var(ACT) | value(1) = 9

KPAD = 32                # OBS padded to 32 so every matmul has K = 32
HP = 24                  # padded head rows: mu [0,8) | var [8,16) | value [16,24)

# ---- packed (transposed) parameter slab: [SLAB_ROWS, H] -------------------
#   rows [ 0, 32)  W1^T padded   [H, KPAD]  (cols >= OBS are zero)
#   rows [32, 64)  W2^T          [H, H]
#   rows [64, 88)  heads^T pad   [HP, H]    (mu rows 64..67, var 72..75, value 80)
ROW_W1T = 0
ROW_W2T = 32
ROW_WHT = 64
SLAB_ROWS = 96
# bias column [SLAB_ROWS, 1] uses the same row layout (b1 / b2 / bh).

BATCH = 512              # batched env states / timesteps
LANES = 128


def _softplus(x):
    # matches torch.nn.Softplus(beta=1, threshold=20)
    return jnp.where(x > 20.0, x, jnp.log1p(jnp.exp(jnp.minimum(x, 20.0))))


def a2c_kernel(xt_ref, slab_ref, bias_ref, out_ref):
    xt = xt_ref[...]                                   # [KPAD, TB] (rows >= OBS zero)

    # static, zero-cost views into the resident parameter slab / bias column
    w1t = slab_ref[ROW_W1T:ROW_W1T + H, :]             # [H, KPAD]
    w2t = slab_ref[ROW_W2T:ROW_W2T + H, :]             # [H, H]
    wht = slab_ref[ROW_WHT:ROW_WHT + HP, :]            # [HP, H]
    b1 = bias_ref[ROW_W1T:ROW_W1T + H, :]              # [H, 1]
    b2 = bias_ref[ROW_W2T:ROW_W2T + H, :]              # [H, 1]
    bh = bias_ref[ROW_WHT:ROW_WHT + HP, :]             # [HP, 1]

    # base_net (transposed): h^T = relu(W^T @ x^T + b)
    h = jnp.maximum(jnp.dot(w1t, xt, preferred_element_type=jnp.float32) + b1, 0.0)
    h = jnp.maximum(jnp.dot(w2t, h, preferred_element_type=jnp.float32) + b2, 0.0)

    # fused heads: one [HP, H] @ [H, TB] matmul, then per-group activations on
    # sublane-aligned 8-row slices (one vreg row-group each, full-lane stores).
    z = jnp.dot(wht, h, preferred_element_type=jnp.float32) + bh       # [HP, TB]
    out_ref[0:8, :] = jnp.tanh(z[0:8, :])                # mu rows (pad: tanh(0)=0)
    out_ref[8:16, :] = _softplus(z[8:16, :]) + 1e-6      # var rows (+1e-6)
    out_ref[16:24, :] = z[16:24, :]                      # value row (+ pad rows)


def pack_params(p):
    """Pack nn.Linear weights (transposed) into [SLAB_ROWS, H] + bias column."""
    slab = jnp.zeros((SLAB_ROWS, H), jnp.float32)
    slab = slab.at[ROW_W1T:ROW_W1T + H, :OBS].set(p["w1"].T)           # [H, OBS]
    slab = slab.at[ROW_W2T:ROW_W2T + H, :H].set(p["w2"].T)             # [H, H]
    slab = slab.at[ROW_WHT:ROW_WHT + ACT, :].set(p["wmu"].T)           # [ACT, H]
    slab = slab.at[ROW_WHT + 8:ROW_WHT + 8 + ACT, :].set(p["wvar"].T)  # [ACT, H]
    slab = slab.at[ROW_WHT + 16:ROW_WHT + 17, :].set(p["wv"].T)        # [1, H]

    bias = jnp.zeros((SLAB_ROWS, 1), jnp.float32)
    bias = bias.at[ROW_W1T:ROW_W1T + H, 0].set(p["b1"].reshape(H))
    bias = bias.at[ROW_W2T:ROW_W2T + H, 0].set(p["b2"].reshape(H))
    bias = bias.at[ROW_WHT:ROW_WHT + ACT, 0].set(p["bmu"].reshape(ACT))
    bias = bias.at[ROW_WHT + 8:ROW_WHT + 8 + ACT, 0].set(p["bvar"].reshape(ACT))
    bias = bias.at[ROW_WHT + 16, 0].set(p["bv"][0, 0])
    return slab, bias


def a2c_forward(x, slab, bias, *, num_blocks=1):
    """x: [B, OBS] f32.  Returns (mu, var, value).

    num_blocks=1 for v5e/v6e (single TensorCore); num_blocks=2 on v7x gives
    exactly one grid step per TensorCore (dimension_semantics="parallel").
    """
    B = x.shape[0]
    tile = LANES * num_blocks
    Bp = ((B + tile - 1) // tile) * tile
    tb = Bp // num_blocks

    # Transposed, zero-padded input: [KPAD, Bp]; rows [0, OBS) hold x^T.
    xt = jnp.zeros((KPAD, Bp), jnp.float32).at[:OBS, :B].set(x.T)

    flops = 2 * Bp * (H * KPAD + H * H + HP * H)
    bytes_accessed = 4 * (KPAD * Bp + SLAB_ROWS * H + SLAB_ROWS + HP * Bp)
    cost = pl.CostEstimate(flops=flops,
                           transcendentals=16 * Bp,        # tanh + exp/log rows
                           bytes_accessed=bytes_accessed)

    out = pl.pallas_call(
        a2c_kernel,
        out_shape=jax.ShapeDtypeStruct((HP, Bp), jnp.float32),
        grid=(num_blocks,),
        in_specs=[
            pl.BlockSpec((KPAD, tb), lambda i: (0, i)),       # x^T lane tile
            pl.BlockSpec((SLAB_ROWS, H), lambda i: (0, 0)),   # resident weights
            pl.BlockSpec((SLAB_ROWS, 1), lambda i: (0, 0)),   # resident biases
        ],
        out_specs=pl.BlockSpec((HP, tb), lambda i: (0, i)),   # packed lane-dense out
        compiler_params=pltpu.CompilerParams(
            dimension_semantics=("parallel",)),
        cost_estimate=cost,
    )(xt, slab, bias)

    mu = out[0:ACT, :B].T
    var = out[8:8 + ACT, :B].T
    value = out[16:17, :B].T
    return mu, var, value


def init_params(key):
    """nn.Linear-style init (uniform +/- 1/sqrt(fan_in)), weights stored [in, out]."""
    def linear(key, fan_in, fan_out):
        kw, kb = jax.random.split(key)
        bound = 1.0 / jnp.sqrt(fan_in)
        w = jax.random.uniform(kw, (fan_in, fan_out), jnp.float32, -bound, bound)
        b = jax.random.uniform(kb, (1, fan_out), jnp.float32, -bound, bound)
        return w, b

    keys = jax.random.split(key, 5)
    w1, b1 = linear(keys[0], OBS, H)
    w2, b2 = linear(keys[1], H, H)
    wmu, bmu = linear(keys[2], H, ACT)
    wvar, bvar = linear(keys[3], H, ACT)
    wv, bv = linear(keys[4], H, 1)
    return dict(w1=w1, b1=b1, w2=w2, b2=b2,
                wmu=wmu, bmu=bmu, wvar=wvar, bvar=bvar, wv=wv, bv=bv)


def a2c_reference(x, p):
    """Pure-JAX reference for correctness check."""
    h = jnp.maximum(x @ p["w1"] + p["b1"], 0.0)
    h = jnp.maximum(h @ p["w2"] + p["b2"], 0.0)
    mu = jnp.tanh(h @ p["wmu"] + p["bmu"])
    var = _softplus(h @ p["wvar"] + p["bvar"]) + 1e-6
    val = h @ p["wv"] + p["bv"]
    return mu, var, val


if __name__ == "__main__":
    key = jax.random.PRNGKey(0)
    kx, kp = jax.random.split(key)
    x = jax.random.normal(kx, (BATCH, OBS), jnp.float32)
    params = init_params(kp)
    slab, bias = pack_params(params)

    mu, var, value = a2c_forward(x, slab, bias)
    jax.block_until_ready((mu, var, value))

    mu_r, var_r, val_r = a2c_reference(x, params)
    assert mu.shape == (BATCH, ACT) and var.shape == (BATCH, ACT) and value.shape == (BATCH, 1)
    assert jnp.allclose(mu, mu_r, atol=1e-4)
    assert jnp.allclose(var, var_r, atol=1e-4)
    assert jnp.allclose(value, val_r, atol=1e-4)
    assert bool(jnp.all(var > 0))

    print("KERNEL_OK")
</pallas_src>

<mosaic_0001>
module attributes {stable_mosaic.version = 11 : i64} {
  func.func @a2c_kernel(%arg0: i32, %arg1: memref<32x512xf32, #tpu.memory_space<vmem>>, %arg2: memref<96x32xf32, #tpu.memory_space<vmem>>, %arg3: memref<96x1xf32, #tpu.memory_space<vmem>>, %arg4: memref<24x512xf32, #tpu.memory_space<vmem>>) attributes {dimension_semantics = [#tpu.dimension_semantics<parallel>], iteration_bounds = array<i64: 1>, scalar_prefetch = 0 : i64, scratch_operands = 0 : i64, tpu.core_type = #tpu.core_type<tc>, window_params = [{transform_indices = @transform_0, window_bounds = array<i64: 32, 512>}, {pipeline_mode = #tpu.pipeline_mode<synchronous>, transform_indices = @transform_1, window_bounds = array<i64: 96, 32>}, {pipeline_mode = #tpu.pipeline_mode<synchronous>, transform_indices = @transform_2, window_bounds = array<i64: 96, 1>}, {transform_indices = @transform_3, window_bounds = array<i64: 24, 512>}]} {
    %c0 = arith.constant 0 : index
    %c0_0 = arith.constant 0 : index
    %0 = vector.load %arg1[%c0, %c0_0] : memref<32x512xf32, #tpu.memory_space<vmem>>, vector<32x512xf32>
    %c0_1 = arith.constant 0 : index
    %c0_2 = arith.constant 0 : index
    %1 = vector.load %arg2[%c0_1, %c0_2] : memref<96x32xf32, #tpu.memory_space<vmem>>, vector<32x32xf32>
    %c32 = arith.constant 32 : index
    %c0_3 = arith.constant 0 : index
    %2 = vector.load %arg2[%c32, %c0_3] : memref<96x32xf32, #tpu.memory_space<vmem>>, vector<32x32xf32>
    %c64 = arith.constant 64 : index
    %c0_4 = arith.constant 0 : index
    %3 = vector.load %arg2[%c64, %c0_4] : memref<96x32xf32, #tpu.memory_space<vmem>>, vector<24x32xf32>
    %c0_5 = arith.constant 0 : index
    %c0_6 = arith.constant 0 : index
    %4 = vector.load %arg3[%c0_5, %c0_6] : memref<96x1xf32, #tpu.memory_space<vmem>>, vector<32x1xf32>
    %c32_7 = arith.constant 32 : index
    %c0_8 = arith.constant 0 : index
    %5 = vector.load %arg3[%c32_7, %c0_8] : memref<96x1xf32, #tpu.memory_space<vmem>>, vector<32x1xf32>
    %c64_9 = arith.constant 64 : index
    %c0_10 = arith.constant 0 : index
    %6 = vector.load %arg3[%c64_9, %c0_10] : memref<96x1xf32, #tpu.memory_space<vmem>>, vector<24x1xf32>
    %cst = arith.constant dense<0.000000e+00> : vector<32x512xf32>
    %7 = tpu.matmul %1, %0, %cst {dimension_numbers = #tpu.dot_dimension_numbers<[1], [0], [0], [1], [0, 0, 1, 1], [], []>} : vector<32x32xf32>, vector<32x512xf32>, vector<32x512xf32> -> vector<32x512xf32>
    %8 = vector.broadcast %4 : vector<32x1xf32> to vector<32x512xf32>
    %9 = arith.addf %7, %8 : vector<32x512xf32>
    %cst_11 = arith.constant 0.000000e+00 : f32
    %10 = vector.broadcast %cst_11 : f32 to vector<32x512xf32>
    %11 = arith.maximumf %9, %10 : vector<32x512xf32>
    %cst_12 = arith.constant dense<0.000000e+00> : vector<32x512xf32>
    %12 = tpu.matmul %2, %11, %cst_12 {dimension_numbers = #tpu.dot_dimension_numbers<[1], [0], [0], [1], [0, 0, 1, 1], [], []>} : vector<32x32xf32>, vector<32x512xf32>, vector<32x512xf32> -> vector<32x512xf32>
    %13 = vector.broadcast %5 : vector<32x1xf32> to vector<32x512xf32>
    %14 = arith.addf %12, %13 : vector<32x512xf32>
    %cst_13 = arith.constant 0.000000e+00 : f32
    %15 = vector.broadcast %cst_13 : f32 to vector<32x512xf32>
    %16 = arith.maximumf %14, %15 : vector<32x512xf32>
    %cst_14 = arith.constant dense<0.000000e+00> : vector<24x512xf32>
    %17 = tpu.matmul %3, %16, %cst_14 {dimension_numbers = #tpu.dot_dimension_numbers<[1], [0], [0], [1], [0, 0, 1, 1], [], []>} : vector<24x32xf32>, vector<32x512xf32>, vector<24x512xf32> -> vector<24x512xf32>
    %18 = vector.broadcast %6 : vector<24x1xf32> to vector<24x512xf32>
    %19 = arith.addf %17, %18 : vector<24x512xf32>
    %20 = vector.extract_strided_slice %19 {offsets = [0, 0], sizes = [8, 512], strides = [1, 1]} : vector<24x512xf32> to vector<8x512xf32>
    %21 = math.tanh %20 : vector<8x512xf32>
    %c0_15 = arith.constant 0 : index
    %c0_16 = arith.constant 0 : index
    %22 = vector.load %arg4[%c0_15, %c0_16] : memref<24x512xf32, #tpu.memory_space<vmem>>, vector<8x512xf32>
    tpu.vector_store %arg4[%c0_15, %c0_16], %21 {strides = array<i32>} : memref<24x512xf32, #tpu.memory_space<vmem>>, vector<8x512xf32>,
    %23 = vector.extract_strided_slice %19 {offsets = [8, 0], sizes = [8, 512], strides = [1, 1]} : vector<24x512xf32> to vector<8x512xf32>
    %cst_17 = arith.constant 2.000000e+01 : f32
    %24 = vector.broadcast %cst_17 : f32 to vector<8x512xf32>
    %25 = arith.cmpf ogt, %23, %24 : vector<8x512xf32>
    %cst_18 = arith.constant 2.000000e+01 : f32
    %26 = vector.broadcast %cst_18 : f32 to vector<8x512xf32>
    %27 = arith.minimumf %23, %26 : vector<8x512xf32>
    %28 = math.exp %27 : vector<8x512xf32>
    %29 = math.log1p %28 : vector<8x512xf32>
    %30 = arith.select %25, %23, %29 : vector<8x512xi1>, vector<8x512xf32>
    %cst_19 = arith.constant 9.99999997E-7 : f32
    %31 = vector.broadcast %cst_19 : f32 to vector<8x512xf32>
    %32 = arith.addf %30, %31 : vector<8x512xf32>
    %c8 = arith.constant 8 : index
    %c0_20 = arith.constant 0 : index
    %33 = vector.load %arg4[%c8, %c0_20] : memref<24x512xf32, #tpu.memory_space<vmem>>, vector<8x512xf32>
    tpu.vector_store %arg4[%c8, %c0_20], %32 {strides = array<i32>} : memref<24x512xf32, #tpu.memory_space<vmem>>, vector<8x512xf32>,
    %34 = vector.extract_strided_slice %19 {offsets = [16, 0], sizes = [8, 512], strides = [1, 1]} : vector<24x512xf32> to vector<8x512xf32>
    %c16 = arith.constant 16 : index
    %c0_21 = arith.constant 0 : index
    %35 = vector.load %arg4[%c16, %c0_21] : memref<24x512xf32, #tpu.memory_space<vmem>>, vector<8x512xf32>
    tpu.vector_store %arg4[%c16, %c0_21], %34 {strides = array<i32>} : memref<24x512xf32, #tpu.memory_space<vmem>>, vector<8x512xf32>,
    return
  }
  func.func @transform_0(%arg0: i32) -> (i32, i32) {
    %c0_i32 = arith.constant 0 : i32
    %c0_i32_0 = arith.constant 0 : i32
    return %c0_i32, %arg0 : i32, i32
  }
  func.func @transform_1(%arg0: i32) -> (i32, i32) {
    %c0_i32 = arith.constant 0 : i32
    %c0_i32_0 = arith.constant 0 : i32
    %c0_i32_1 = arith.constant 0 : i32
    return %c0_i32, %c0_i32_0 : i32, i32
  }
  func.func @transform_2(%arg0: i32) -> (i32, i32) {
    %c0_i32 = arith.constant 0 : i32
    %c0_i32_0 = arith.constant 0 : i32
    %c0_i32_1 = arith.constant 0 : i32
    return %c0_i32, %c0_i32_0 : i32, i32
  }
  func.func @transform_3(%arg0: i32) -> (i32, i32) {
    %c0_i32 = arith.constant 0 : i32
    %c0_i32_0 = arith.constant 0 : i32
    return %c0_i32, %arg0 : i32, i32
  }
}

</mosaic_0001>

<llo_original>
// kernel: tpu_custom_call.1
$region0: #{tpu_custom_call.1}
  #allocation0 [shape = 'u32[]', space=smem, size = 0x4, offset = 0x4, fixed_abs, tag = 'smem constant byte address 0x4 - core index']
  #allocation1 [shape = 'u32[72,128]{1,0:T(1,128)}', space=vmem, size = 0x9000, scoped, tag = 'internal scratch']
  %s0 = inlined_call_operand.vmem [shape: f32[32,512], index: 0, kind: input, shape index: {}]
  %s1 = inlined_call_operand.vmem [shape: f32[96,32], index: 1, kind: input, shape index: {}]
  %s2 = inlined_call_operand.vmem [shape: f32[96,1], index: 2, kind: input, shape index: {}]
  %s3 = inlined_call_operand.hbm [shape: f32[24,512], index: 3, kind: output, shape index: {}]
  %s4 = sld [smem:[#allocation0]]
  $region22: #{tpu_custom_call.1} parent=0
    _
  %s6 = ssub.s32 1, %s4
  %s7 = scalar_select 0, %s6, %s4
  $region1: #{tpu_custom_call.1} parent=0
    #allocation2 [shape = 'u8[49152]{0}', space=vmem, size = 0xc000, scoped, tag = 'output window, operand 0, single buffered']
    #allocation3 [shape = 's32[1]{0}', space=sflag, size = 0x4, scoped, tag = 'scoped memory for tpu_custom_call.1']
    %8 = vsyncpa [#allocation3], 0
    // Predicated region
    $region2: #{tpu_custom_call.1} parent=1 // pred_check
      _
    $region3: #{tpu_custom_call.1} parent=1 // pred_check_branch
      %10 = sbr.rel (0) target = $region5
    $region4: #{tpu_custom_call.1} parent=1 // pred_region
      _
    $region5: #{tpu_custom_call.1} parent=1 // pred_fallthru
      _
    // Predicated region
    $region6: #{tpu_custom_call.1} parent=1 // pred_check
      _
    $region7: #{tpu_custom_call.1} parent=1 // pred_check_branch
      %12 = sbr.rel (0) target = $region9
    $region8: #{tpu_custom_call.1} parent=1 // pred_region
      _
    $region9: #{tpu_custom_call.1} parent=1 // pred_fallthru
      _
    // Predicated region
    $region10: #{tpu_custom_call.1} parent=1 // pred_check
      _
    $region11: #{tpu_custom_call.1} parent=1 // pred_check_branch
      %14 = sbr.rel (0) target = $region13
    $region12: #{tpu_custom_call.1} parent=1 // pred_region
      _
    $region13: #{tpu_custom_call.1} parent=1 // pred_fallthru
      _
    %v15 = vld [vmem:[%s0] sm:$0xff]
    %v16 = vld [vmem:[%s0 + $0x8] sm:$0xff]
    %v17 = vld [vmem:[%s0 + $0x10] sm:$0xff]
    %v18 = vld [vmem:[%s0 + $0x18] sm:$0xff]
    %v19 = vld [vmem:[%s0 + $0x20] sm:$0xff]
    %v20 = vld [vmem:[%s0 + $0x28] sm:$0xff]
    %v21 = vld [vmem:[%s0 + $0x30] sm:$0xff]
    %v22 = vld [vmem:[%s0 + $0x38] sm:$0xff]
    %v23 = vld [vmem:[%s0 + $0x40] sm:$0xff]
    %v24 = vld [vmem:[%s0 + $0x48] sm:$0xff]
    %v25 = vld [vmem:[%s0 + $0x50] sm:$0xff]
    %v26 = vld [vmem:[%s0 + $0x58] sm:$0xff]
    %v27 = vld [vmem:[%s0 + $0x60] sm:$0xff]
    %v28 = vld [vmem:[%s0 + $0x68] sm:$0xff]
    %v29 = vld [vmem:[%s0 + $0x70] sm:$0xff]
    %v30 = vld [vmem:[%s0 + $0x78] sm:$0xff]
    %v31 = vld [vmem:[%s1] sm:$0xff]
    %v32 = vld [vmem:[%s1 + $0x8] sm:$0xff]
    %v33 = vld [vmem:[%s1 + $0x10] sm:$0xff]
    %v34 = vld [vmem:[%s1 + $0x18] sm:$0xff]
    %v35 = vld [vmem:[%s1 + $0x20] sm:$0xff]
    %v36 = vld [vmem:[%s1 + $0x28] sm:$0xff]
    %v37 = vld [vmem:[%s1 + $0x30] sm:$0xff]
    %v38 = vld [vmem:[%s1 + $0x38] sm:$0xff]
    %v39 = vld [vmem:[%s1 + $0x40] sm:$0xff]
    %v40 = vld [vmem:[%s1 + $0x48] sm:$0xff]
    %v41 = vld [vmem:[%s1 + $0x50] sm:$0xff]
    %v42 = vld [vmem:[%s2] sm:$0xff]
    %v43 = vld [vmem:[%s2 + $0x8] sm:$0xff]
    %v44 = vld [vmem:[%s2 + $0x10] sm:$0xff]
    %v45 = vld [vmem:[%s2 + $0x18] sm:$0xff]
    %v46 = vld [vmem:[%s2 + $0x20] sm:$0xff]
    %v47 = vld [vmem:[%s2 + $0x28] sm:$0xff]
    %v48 = vld [vmem:[%s2 + $0x30] sm:$0xff]
    %v49 = vld [vmem:[%s2 + $0x38] sm:$0xff]
    %v50 = vld [vmem:[%s2 + $0x40] sm:$0xff]
    %v51 = vld [vmem:[%s2 + $0x48] sm:$0xff]
    %v52 = vld [vmem:[%s2 + $0x50] sm:$0xff]
    %54 = vset.pattern.permute.xlu0 0
    %55 = vperm.xlu0 %54, %v42
    %v56 = vpop.permute.xlu0 %55
    %59 = vset.pattern.permute.xlu0 0
    %60 = vperm.xlu0 %59, %v43
    %v61 = vpop.permute.xlu0 %60
    %64 = vset.pattern.permute.xlu0 0
    %65 = vperm.xlu0 %64, %v44
    %v66 = vpop.permute.xlu0 %65
    %69 = vset.pattern.permute.xlu0 0
    %70 = vperm.xlu0 %69, %v45
    %v71 = vpop.permute.xlu0 %70
    %vm73 = vcmask 261120
    %v75 = vsel %vm73, %v31, 0
    %v78 = vsel %vm73, %v32, 0
    %v81 = vsel %vm73, %v33, 0
    %v84 = vsel %vm73, %v34, 0
    %86 = vmatpush.msra.mxu0 0.0
    %87 = vmatpush.msra.mxu0 0.0
    %88 = vmatpush.msra.mxu0 0.0
    %89 = vmatpush.msra.mxu0 0.0
    %90 = vmatpush.msra.mxu0 0.0
    %91 = vmatpush.msra.mxu0 0.0
    %92 = vmatpush.msra.mxu0 0.0
    %93 = vmatpush.msra.mxu0 0.0
    %94 = vmatpush.msra.mxu0 0.0
    %95 = vmatpush.msra.mxu0 0.0
    %96 = vmatpush.msra.mxu0 0.0
    %97 = vmatpush.msra.mxu0 0.0
    %98 = vmatpush.msra.mxu0 %v27
    %99 = vmatpush.msra.mxu0 %v23
    %100 = vmatpush.msra.mxu0 %v19
    %101 = vmatpush.msra.mxu0 %v15
    %102 = vmatmul.f32.gmra.mxu0 %v75
    %v103 = vpop.f32.mrf.mxu0
    %v104 = vadd.f32 %v56, %v103
    %105 = vmatmul.f32.gmra.mxu0 %v78
    %v106 = vpop.f32.mrf.mxu0
    %v107 = vadd.f32 %v61, %v106
    %108 = vmatmul.f32.gmra.mxu0 %v81
    %v109 = vpop.f32.mrf.mxu0
    %v110 = vadd.f32 %v66, %v109
    %111 = vmatmul.f32.gmra.mxu0 %v84
    %v112 = vpop.f32.mrf.mxu0
    %v113 = vadd.f32 %v71, %v112
    %114 = vdwg.mxu0
    %115 = vmatpush.msra.mxu0 0.0
    %116 = vmatpush.msra.mxu0 0.0
    %117 = vmatpush.msra.mxu0 0.0
    %118 = vmatpush.msra.mxu0 0.0
    %119 = vmatpush.msra.mxu0 0.0
    %120 = vmatpush.msra.mxu0 0.0
    %121 = vmatpush.msra.mxu0 0.0
    %122 = vmatpush.msra.mxu0 0.0
    %123 = vmatpush.msra.mxu0 0.0
    %124 = vmatpush.msra.mxu0 0.0
    %125 = vmatpush.msra.mxu0 0.0
    %126 = vmatpush.msra.mxu0 0.0
    %127 = vmatpush.msra.mxu0 %v28
    %128 = vmatpush.msra.mxu0 %v24
    %129 = vmatpush.msra.mxu0 %v20
    %130 = vmatpush.msra.mxu0 %v16
    %131 = vmatmul.f32.gmra.mxu0 %v75
    %v132 = vpop.f32.mrf.mxu0
    %v133 = vadd.f32 %v56, %v132
    %134 = vmatmul.f32.gmra.mxu0 %v78
    %v135 = vpop.f32.mrf.mxu0
    %v136 = vadd.f32 %v61, %v135
    %137 = vmatmul.f32.gmra.mxu0 %v81
    %v138 = vpop.f32.mrf.mxu0
    %v139 = vadd.f32 %v66, %v138
    %140 = vmatmul.f32.gmra.mxu0 %v84
    %v141 = vpop.f32.mrf.mxu0
    %v142 = vadd.f32 %v71, %v141
    %143 = vdwg.mxu0
    %144 = vmatpush.msra.mxu0 0.0
    %145 = vmatpush.msra.mxu0 0.0
    %146 = vmatpush.msra.mxu0 0.0
    %147 = vmatpush.msra.mxu0 0.0
    %148 = vmatpush.msra.mxu0 0.0
    %149 = vmatpush.msra.mxu0 0.0
    %150 = vmatpush.msra.mxu0 0.0
    %151 = vmatpush.msra.mxu0 0.0
    %152 = vmatpush.msra.mxu0 0.0
    %153 = vmatpush.msra.mxu0 0.0
    %154 = vmatpush.msra.mxu0 0.0
    %155 = vmatpush.msra.mxu0 0.0
    %156 = vmatpush.msra.mxu0 %v29
    %157 = vmatpush.msra.mxu0 %v25
    %158 = vmatpush.msra.mxu0 %v21
    %159 = vmatpush.msra.mxu0 %v17
    %160 = vmatmul.f32.gmra.mxu0 %v75
    %v161 = vpop.f32.mrf.mxu0
    %v162 = vadd.f32 %v56, %v161
    %163 = vmatmul.f32.gmra.mxu0 %v78
    %v164 = vpop.f32.mrf.mxu0
    %v165 = vadd.f32 %v61, %v164
    %166 = vmatmul.f32.gmra.mxu0 %v81
    %v167 = vpop.f32.mrf.mxu0
    %v168 = vadd.f32 %v66, %v167
    %169 = vmatmul.f32.gmra.mxu0 %v84
    %v170 = vpop.f32.mrf.mxu0
    %v171 = vadd.f32 %v71, %v170
    %172 = vdwg.mxu0
    %173 = vmatpush.msra.mxu0 0.0
    %174 = vmatpush.msra.mxu0 0.0
    %175 = vmatpush.msra.mxu0 0.0
    %176 = vmatpush.msra.mxu0 0.0
    %177 = vmatpush.msra.mxu0 0.0
    %178 = vmatpush.msra.mxu0 0.0
    %179 = vmatpush.msra.mxu0 0.0
    %180 = vmatpush.msra.mxu0 0.0
    %181 = vmatpush.msra.mxu0 0.0
    %182 = vmatpush.msra.mxu0 0.0
    %183 = vmatpush.msra.mxu0 0.0
    %184 = vmatpush.msra.mxu0 0.0
    %185 = vmatpush.msra.mxu0 %v30
    %186 = vmatpush.msra.mxu0 %v26
    %187 = vmatpush.msra.mxu0 %v22
    %188 = vmatpush.msra.mxu0 %v18
    %189 = vmatmul.f32.gmra.mxu0 %v75
    %v190 = vpop.f32.mrf.mxu0
    %v191 = vadd.f32 %v56, %v190
    %192 = vmatmul.f32.gmra.mxu0 %v78
    %v193 = vpop.f32.mrf.mxu0
    %v194 = vadd.f32 %v61, %v193
    %195 = vmatmul.f32.gmra.mxu0 %v81
    %v196 = vpop.f32.mrf.mxu0
    %v197 = vadd.f32 %v66, %v196
    %198 = vmatmul.f32.gmra.mxu0 %v84
    %v199 = vpop.f32.mrf.mxu0
    %v200 = vadd.f32 %v71, %v199
    %201 = vdwg.mxu0
    %v202 = vmax.f32 %v104, 0.0
    %v203 = vmax.f32 %v133, 0.0
    %v204 = vmax.f32 %v162, 0.0
    %v205 = vmax.f32 %v191, 0.0
    %v206 = vmax.f32 %v107, 0.0
    %v207 = vmax.f32 %v136, 0.0
    %v208 = vmax.f32 %v165, 0.0
    %v209 = vmax.f32 %v194, 0.0
    %v210 = vmax.f32 %v110, 0.0
    %v211 = vmax.f32 %v139, 0.0
    %v212 = vmax.f32 %v168, 0.0
    %v213 = vmax.f32 %v197, 0.0
    %v214 = vmax.f32 %v113, 0.0
    %v215 = vmax.f32 %v142, 0.0
    %v216 = vmax.f32 %v171, 0.0
    %v217 = vmax.f32 %v200, 0.0
    %219 = vset.pattern.permute.xlu0 0
    %220 = vperm.xlu0 %219, %v46
    %v221 = vpop.permute.xlu0 %220
    %224 = vset.pattern.permute.xlu0 0
    %225 = vperm.xlu0 %224, %v47
    %v226 = vpop.permute.xlu0 %225
    %229 = vset.pattern.permute.xlu0 0
    %230 = vperm.xlu0 %229, %v48
    %v231 = vpop.permute.xlu0 %230
    %234 = vset.pattern.permute.xlu0 0
    %235 = vperm.xlu0 %234, %v49
    %v236 = vpop.permute.xlu0 %235
    %v239 = vsel %vm73, %v35, 0
    %v242 = vsel %vm73, %v36, 0
    %v245 = vsel %vm73, %v37, 0
    %v248 = vsel %vm73, %v38, 0
    %250 = vmatpush.msra.mxu0 0.0
    %251 = vmatpush.msra.mxu0 0.0
    %252 = vmatpush.msra.mxu0 0.0
    %253 = vmatpush.msra.mxu0 0.0
    %254 = vmatpush.msra.mxu0 0.0
    %255 = vmatpush.msra.mxu0 0.0
    %256 = vmatpush.msra.mxu0 0.0
    %257 = vmatpush.msra.mxu0 0.0
    %258 = vmatpush.msra.mxu0 0.0
    %259 = vmatpush.msra.mxu0 0.0
    %260 = vmatpush.msra.mxu0 0.0
    %261 = vmatpush.msra.mxu0 0.0
    %262 = vmatpush.msra.mxu0 %v214
    %263 = vmatpush.msra.mxu0 %v210
    %264 = vmatpush.msra.mxu0 %v206
    %265 = vmatpush.msra.mxu0 %v202
    %266 = vmatmul.f32.gmra.mxu0 %v239
    %v267 = vpop.f32.mrf.mxu0
    %v268 = vadd.f32 %v221, %v267
    %269 = vmatmul.f32.gmra.mxu0 %v242
    %v270 = vpop.f32.mrf.mxu0
    %v271 = vadd.f32 %v226, %v270
    %272 = vmatmul.f32.gmra.mxu0 %v245
    %v273 = vpop.f32.mrf.mxu0
    %v274 = vadd.f32 %v231, %v273
    %275 = vmatmul.f32.gmra.mxu0 %v248
    %v276 = vpop.f32.mrf.mxu0
    %v277 = vadd.f32 %v236, %v276
    %278 = vdwg.mxu0
    %279 = vmatpush.msra.mxu0 0.0
    %280 = vmatpush.msra.mxu0 0.0
    %281 = vmatpush.msra.mxu0 0.0
    %282 = vmatpush.msra.mxu0 0.0
    %283 = vmatpush.msra.mxu0 0.0
    %284 = vmatpush.msra.mxu0 0.0
    %285 = vmatpush.msra.mxu0 0.0
    %286 = vmatpush.msra.mxu0 0.0
    %287 = vmatpush.msra.mxu0 0.0
    %288 = vmatpush.msra.mxu0 0.0
    %289 = vmatpush.msra.mxu0 0.0
    %290 = vmatpush.msra.mxu0 0.0
    %291 = vmatpush.msra.mxu0 %v215
    %292 = vmatpush.msra.mxu0 %v211
    %293 = vmatpush.msra.mxu0 %v207
    %294 = vmatpush.msra.mxu0 %v203
    %295 = vmatmul.f32.gmra.mxu0 %v239
    %v296 = vpop.f32.mrf.mxu0
    %v297 = vadd.f32 %v221, %v296
    %298 = vmatmul.f32.gmra.mxu0 %v242
    %v299 = vpop.f32.mrf.mxu0
    %v300 = vadd.f32 %v226, %v299
    %301 = vmatmul.f32.gmra.mxu0 %v245
    %v302 = vpop.f32.mrf.mxu0
    %v303 = vadd.f32 %v231, %v302
    %304 = vmatmul.f32.gmra.mxu0 %v248
    %v305 = vpop.f32.mrf.mxu0
    %v306 = vadd.f32 %v236, %v305
    %307 = vdwg.mxu0
    %308 = vmatpush.msra.mxu0 0.0
    %309 = vmatpush.msra.mxu0 0.0
    %310 = vmatpush.msra.mxu0 0.0
    %311 = vmatpush.msra.mxu0 0.0
    %312 = vmatpush.msra.mxu0 0.0
    %313 = vmatpush.msra.mxu0 0.0
    %314 = vmatpush.msra.mxu0 0.0
    %315 = vmatpush.msra.mxu0 0.0
    %316 = vmatpush.msra.mxu0 0.0
    %317 = vmatpush.msra.mxu0 0.0
    %318 = vmatpush.msra.mxu0 0.0
    %319 = vmatpush.msra.mxu0 0.0
    %320 = vmatpush.msra.mxu0 %v216
    %321 = vmatpush.msra.mxu0 %v212
    %322 = vmatpush.msra.mxu0 %v208
    %323 = vmatpush.msra.mxu0 %v204
    %324 = vmatmul.f32.gmra.mxu0 %v239
    %v325 = vpop.f32.mrf.mxu0
    %v326 = vadd.f32 %v221, %v325
    %327 = vmatmul.f32.gmra.mxu0 %v242
    %v328 = vpop.f32.mrf.mxu0
    %v329 = vadd.f32 %v226, %v328
    %330 = vmatmul.f32.gmra.mxu0 %v245
    %v331 = vpop.f32.mrf.mxu0
    %v332 = vadd.f32 %v231, %v331
    %333 = vmatmul.f32.gmra.mxu0 %v248
    %v334 = vpop.f32.mrf.mxu0
    %v335 = vadd.f32 %v236, %v334
    %336 = vdwg.mxu0
    %337 = vmatpush.msra.mxu0 0.0
    %338 = vmatpush.msra.mxu0 0.0
    %339 = vmatpush.msra.mxu0 0.0
    %340 = vmatpush.msra.mxu0 0.0
    %341 = vmatpush.msra.mxu0 0.0
    %342 = vmatpush.msra.mxu0 0.0
    %343 = vmatpush.msra.mxu0 0.0
    %344 = vmatpush.msra.mxu0 0.0
    %345 = vmatpush.msra.mxu0 0.0
    %346 = vmatpush.msra.mxu0 0.0
    %347 = vmatpush.msra.mxu0 0.0
    %348 = vmatpush.msra.mxu0 0.0
    %349 = vmatpush.msra.mxu0 %v217
    %350 = vmatpush.msra.mxu0 %v213
    %351 = vmatpush.msra.mxu0 %v209
    %352 = vmatpush.msra.mxu0 %v205
    %353 = vmatmul.f32.gmra.mxu0 %v239
    %v354 = vpop.f32.mrf.mxu0
    %v355 = vadd.f32 %v221, %v354
    %356 = vmatmul.f32.gmra.mxu0 %v242
    %v357 = vpop.f32.mrf.mxu0
    %v358 = vadd.f32 %v226, %v357
    %359 = vmatmul.f32.gmra.mxu0 %v245
    %v360 = vpop.f32.mrf.mxu0
    %v361 = vadd.f32 %v231, %v360
    %362 = vmatmul.f32.gmra.mxu0 %v248
    %v363 = vpop.f32.mrf.mxu0
    %v364 = vadd.f32 %v236, %v363
    %365 = vdwg.mxu0
    %v366 = vmax.f32 %v268, 0.0
    %v367 = vmax.f32 %v297, 0.0
    %v368 = vmax.f32 %v326, 0.0
    %v369 = vmax.f32 %v355, 0.0
    %v370 = vmax.f32 %v271, 0.0
    %v371 = vmax.f32 %v300, 0.0
    %v372 = vmax.f32 %v329, 0.0
    %v373 = vmax.f32 %v358, 0.0
    %v374 = vmax.f32 %v274, 0.0
    %v375 = vmax.f32 %v303, 0.0
    %v376 = vmax.f32 %v332, 0.0
    %v377 = vmax.f32 %v361, 0.0
    %v378 = vmax.f32 %v277, 0.0
    %v379 = vmax.f32 %v306, 0.0
    %v380 = vmax.f32 %v335, 0.0
    %v381 = vmax.f32 %v364, 0.0
    %383 = vset.pattern.permute.xlu0 0
    %384 = vperm.xlu0 %383, %v50
    %v385 = vpop.permute.xlu0 %384
    %388 = vset.pattern.permute.xlu0 0
    %389 = vperm.xlu0 %388, %v51
    %v390 = vpop.permute.xlu0 %389
    %393 = vset.pattern.permute.xlu0 0
    %394 = vperm.xlu0 %393, %v52
    %v395 = vpop.permute.xlu0 %394
    %v398 = vsel %vm73, %v39, 0
    %v401 = vsel %vm73, %v40, 0
    %v404 = vsel %vm73, %v41, 0
    %406 = vmatpush.msra.mxu0 0.0
    %407 = vmatpush.msra.mxu0 0.0
    %408 = vmatpush.msra.mxu0 0.0
    %409 = vmatpush.msra.mxu0 0.0
    %410 = vmatpush.msra.mxu0 0.0
    %411 = vmatpush.msra.mxu0 0.0
    %412 = vmatpush.msra.mxu0 0.0
    %413 = vmatpush.msra.mxu0 0.0
    %414 = vmatpush.msra.mxu0 0.0
    %415 = vmatpush.msra.mxu0 0.0
    %416 = vmatpush.msra.mxu0 0.0
    %417 = vmatpush.msra.mxu0 0.0
    %418 = vmatpush.msra.mxu0 %v378
    %419 = vmatpush.msra.mxu0 %v374
    %420 = vmatpush.msra.mxu0 %v370
    %421 = vmatpush.msra.mxu0 %v366
    %422 = vmatmul.f32.gmra.mxu0 %v398
    %v423 = vpop.f32.mrf.mxu0
    %v424 = vadd.f32 %v385, %v423
    %425 = vmatmul.f32.gmra.mxu0 %v401
    %v426 = vpop.f32.mrf.mxu0
    %v427 = vadd.f32 %v390, %v426
    %428 = vmatmul.f32.gmra.mxu0 %v404
    %v429 = vpop.f32.mrf.mxu0
    %v430 = vadd.f32 %v395, %v429
    %431 = vdwg.mxu0
    %432 = vmatpush.msra.mxu0 0.0
    %433 = vmatpush.msra.mxu0 0.0
    %434 = vmatpush.msra.mxu0 0.0
    %435 = vmatpush.msra.mxu0 0.0
    %436 = vmatpush.msra.mxu0 0.0
    %437 = vmatpush.msra.mxu0 0.0
    %438 = vmatpush.msra.mxu0 0.0
    %439 = vmatpush.msra.mxu0 0.0
    %440 = vmatpush.msra.mxu0 0.0
    %441 = vmatpush.msra.mxu0 0.0
    %442 = vmatpush.msra.mxu0 0.0
    %443 = vmatpush.msra.mxu0 0.0
    %444 = vmatpush.msra.mxu0 %v379
    %445 = vmatpush.msra.mxu0 %v375
    %446 = vmatpush.msra.mxu0 %v371
    %447 = vmatpush.msra.mxu0 %v367
    %448 = vmatmul.f32.gmra.mxu0 %v398
    %v449 = vpop.f32.mrf.mxu0
    %v450 = vadd.f32 %v385, %v449
    %451 = vmatmul.f32.gmra.mxu0 %v401
    %v452 = vpop.f32.mrf.mxu0
    %v453 = vadd.f32 %v390, %v452
    %454 = vmatmul.f32.gmra.mxu0 %v404
    %v455 = vpop.f32.mrf.mxu0
    %v456 = vadd.f32 %v395, %v455
    %457 = vdwg.mxu0
    %458 = vmatpush.msra.mxu0 0.0
    %459 = vmatpush.msra.mxu0 0.0
    %460 = vmatpush.msra.mxu0 0.0
    %461 = vmatpush.msra.mxu0 0.0
    %462 = vmatpush.msra.mxu0 0.0
    %463 = vmatpush.msra.mxu0 0.0
    %464 = vmatpush.msra.mxu0 0.0
    %465 = vmatpush.msra.mxu0 0.0
    %466 = vmatpush.msra.mxu0 0.0
    %467 = vmatpush.msra.mxu0 0.0
    %468 = vmatpush.msra.mxu0 0.0
    %469 = vmatpush.msra.mxu0 0.0
    %470 = vmatpush.msra.mxu0 %v380
    %471 = vmatpush.msra.mxu0 %v376
    %472 = vmatpush.msra.mxu0 %v372
    %473 = vmatpush.msra.mxu0 %v368
    %474 = vmatmul.f32.gmra.mxu0 %v398
    %v475 = vpop.f32.mrf.mxu0
    %v476 = vadd.f32 %v385, %v475
    %477 = vmatmul.f32.gmra.mxu0 %v401
    %v478 = vpop.f32.mrf.mxu0
    %v479 = vadd.f32 %v390, %v478
    %480 = vmatmul.f32.gmra.mxu0 %v404
    %v481 = vpop.f32.mrf.mxu0
    %v482 = vadd.f32 %v395, %v481
    %483 = vdwg.mxu0
    %484 = vmatpush.msra.mxu0 0.0
    %485 = vmatpush.msra.mxu0 0.0
    %486 = vmatpush.msra.mxu0 0.0
    %487 = vmatpush.msra.mxu0 0.0
    %488 = vmatpush.msra.mxu0 0.0
    %489 = vmatpush.msra.mxu0 0.0
    %490 = vmatpush.msra.mxu0 0.0
    %491 = vmatpush.msra.mxu0 0.0
    %492 = vmatpush.msra.mxu0 0.0
    %493 = vmatpush.msra.mxu0 0.0
    %494 = vmatpush.msra.mxu0 0.0
    %495 = vmatpush.msra.mxu0 0.0
    %496 = vmatpush.msra.mxu0 %v381
    %497 = vmatpush.msra.mxu0 %v377
    %498 = vmatpush.msra.mxu0 %v373
    %499 = vmatpush.msra.mxu0 %v369
    %500 = vmatmul.f32.gmra.mxu0 %v398
    %v501 = vpop.f32.mrf.mxu0
    %v502 = vadd.f32 %v385, %v501
    %503 = vmatmul.f32.gmra.mxu0 %v401
    %v504 = vpop.f32.mrf.mxu0
    %v505 = vadd.f32 %v390, %v504
    %506 = vmatmul.f32.gmra.mxu0 %v404
    %v507 = vpop.f32.mrf.mxu0
    %v508 = vadd.f32 %v395, %v507
    %509 = vdwg.mxu0
    %v510 = vtanh.pop %v424
    %v511 = vtanh.pop %v450
    %v512 = vtanh.pop %v476
    %v513 = vtanh.pop %v502
    %514 = vst [vmem:[#allocation2] sm:$0xff] %v510
    %515 = vst [vmem:[#allocation2 + $0x8] sm:$0xff] %v511
    %516 = vst [vmem:[#allocation2 + $0x10] sm:$0xff] %v512
    %517 = vst [vmem:[#allocation2 + $0x18] sm:$0xff] %v513
    %vm518 = vcmp.gt.f32.partialorder %v427, 20.0
    %vm519 = vcmp.gt.f32.partialorder %v453, 20.0
    %vm520 = vcmp.gt.f32.partialorder %v479, 20.0
    %vm521 = vcmp.gt.f32.partialorder %v505, 20.0
    %v522 = vmin.f32 %v427, 20.0
    %v523 = vmin.f32 %v453, 20.0
    %v524 = vmin.f32 %v479, 20.0
    %v525 = vmin.f32 %v505, 20.0
    %v526 = vmul.f32 %v522, 1.442695
    %v527 = vpow.pop %v526
    %v528 = vmul.f32 %v523, 1.442695
    %v529 = vpow.pop %v528
    %v530 = vmul.f32 %v524, 1.442695
    %v531 = vpow.pop %v530
    %v532 = vmul.f32 %v525, 1.442695
    %v533 = vpow.pop %v532
    %v534 = vadd.f32 %v527, 1.0
    %v535 = vlog2.pop %v534
    %v536 = vmul.f32 %v535, 0.6931472
    %v537 = vmul.f32 -0.5, %v527
    %v538 = vadd.f32 %v537, 1.0
    %v539 = vmul.f32 %v538, %v527
    %v540 = vand.u32 2147483647, %v527
    %vm541 = vcmp.lt.f32.partialorder %v540, 0.0004427343
    %v542 = vsel %vm541, %v539, %v536
    %v543 = vadd.f32 %v529, 1.0
    %v544 = vlog2.pop %v543
    %v545 = vmul.f32 %v544, 0.6931472
    %v546 = vmul.f32 -0.5, %v529
    %v547 = vadd.f32 %v546, 1.0
    %v548 = vmul.f32 %v547, %v529
    %v549 = vand.u32 2147483647, %v529
    %vm550 = vcmp.lt.f32.partialorder %v549, 0.0004427343
    %v551 = vsel %vm550, %v548, %v545
    %v552 = vadd.f32 %v531, 1.0
    %v553 = vlog2.pop %v552
    %v554 = vmul.f32 %v553, 0.6931472
    %v555 = vmul.f32 -0.5, %v531
    %v556 = vadd.f32 %v555, 1.0
    %v557 = vmul.f32 %v556, %v531
    %v558 = vand.u32 2147483647, %v531
    %vm559 = vcmp.lt.f32.partialorder %v558, 0.0004427343
    %v560 = vsel %vm559, %v557, %v554
    %v561 = vadd.f32 %v533, 1.0
    %v562 = vlog2.pop %v561
    %v563 = vmul.f32 %v562, 0.6931472
    %v564 = vmul.f32 -0.5, %v533
    %v565 = vadd.f32 %v564, 1.0
    %v566 = vmul.f32 %v565, %v533
    %v567 = vand.u32 2147483647, %v533
    %vm568 = vcmp.lt.f32.partialorder %v567, 0.0004427343
    %v569 = vsel %vm568, %v566, %v563
    %v570 = vsel %vm518, %v427, %v542
    %v571 = vsel %vm519, %v453, %v551
    %v572 = vsel %vm520, %v479, %v560
    %v573 = vsel %vm521, %v505, %v569
    %v574 = vadd.f32 %v570, 1e-06
    %v575 = vadd.f32 %v571, 1e-06
    %v576 = vadd.f32 %v572, 1e-06
    %v577 = vadd.f32 %v573, 1e-06
    %578 = vst [vmem:[#allocation2 + $0x20] sm:$0xff] %v574
    %579 = vst [vmem:[#allocation2 + $0x28] sm:$0xff] %v575
    %580 = vst [vmem:[#allocation2 + $0x30] sm:$0xff] %v576
    %581 = vst [vmem:[#allocation2 + $0x38] sm:$0xff] %v577
    %582 = vst [vmem:[#allocation2 + $0x40] sm:$0xff] %v430
    %583 = vst [vmem:[#allocation2 + $0x48] sm:$0xff] %v456
    %584 = vst [vmem:[#allocation2 + $0x50] sm:$0xff] %v482
    %585 = vst [vmem:[#allocation2 + $0x58] sm:$0xff] %v508
    // Predicated region
    $region14: #{tpu_custom_call.1} parent=1 // pred_check
      _
    $region15: #{tpu_custom_call.1} parent=1 // pred_check_branch
      %587 = sbr.rel (0) target = $region17
    $region16: #{tpu_custom_call.1} parent=1 // pred_region
      %589 = vsyncadd [#allocation3], 0
      %s590 = sshll.u32 [#allocation2], 4
      %s591 = int_to_ptr.vmem [resolvable:$true] %s590
      %s592 = sshll.u32 %s3, 4
      %s593 = int_to_ptr.hbm [resolvable:$true] %s592
      %598 = dma.vmem_to_hbm [thread:$0]  %s591, 1536, %s593, [#allocation3], 512, 512, 32
    $region17: #{tpu_custom_call.1} parent=1 // pred_fallthru
      _
    // Predicated region
    $region18: #{tpu_custom_call.1} parent=1 // pred_check
      _
    $region19: #{tpu_custom_call.1} parent=1 // pred_check_branch
      %600 = sbr.rel (0) target = $region21
    $region20: #{tpu_custom_call.1} parent=1 // pred_region
      %602 = dma.done [#allocation3], 1536
    $region21: #{tpu_custom_call.1} parent=1 // pred_fallthru
      _
    %603 = vsyncpa [#allocation3], 1

</llo_original>
